<compile_context>
chip_gen: v7x
topology: tpu7x:2x2x1
jax: 0.10.0
libtpu: 0.0.40
codegen_flags: <defaults>
</compile_context>

<pallas_src>
import functools

import jax
import jax.numpy as jnp
from jax.experimental import pallas as pl
from jax.experimental.pallas import tpu as pltpu


def _round_up(x, m):
    return (x + m - 1) // m * m


def _dwl_kernel(logits_ref, labels_ref, weight_ref, out_ref, acc_ref, *,
                tile_n, tiles_per_chunk, n_rows):
    # logits_ref: (tile_n, V) float, labels_ref: (tile_n, 1) int32,
    # weight_ref: (tile_n, 1) f32, out_ref: (1, 1) f32 per chunk,
    # acc_ref:    (tile_n, 1) f32 VMEM scratch (per-row partial sums).
    c = pl.program_id(0)          # "parallel" chunk axis (megacore friendly)
    i = pl.program_id(1)          # "arbitrary" reduction axis within a chunk

    @pl.when(i == 0)
    def _():
        acc_ref[...] = jnp.zeros_like(acc_ref)

    # DMA stays in the input dtype (bf16-friendly); upcast to f32 in-register.
    logits = logits_ref[...].astype(jnp.float32)                 # (tile_n, V)
    labels = labels_ref[...]                                     # (tile_n, 1)
    weight = weight_ref[...]                                     # (tile_n, 1)

    # Numerically stable log-softmax pieces; `shifted` is reused for both the
    # exp-sum and the target-logit pick (no one-hot multiply, no int->f32 cast).
    row_max = jnp.max(logits, axis=-1, keepdims=True)            # (tile_n, 1)
    shifted = logits - row_max                                    # (tile_n, V)
    sum_exp = jnp.sum(jnp.exp(shifted), axis=-1, keepdims=True)   # (tile_n, 1)

    col = jax.lax.broadcasted_iota(jnp.int32, (1, logits.shape[1]), 1)
    picked = jnp.sum(jnp.where(col == labels, shifted, 0.0),
                     axis=-1, keepdims=True)                      # (tile_n, 1)

    base_loss = jnp.log(sum_exp) - picked                         # per-token CE

    # Mask tail / duplicated-clamped rows by GLOBAL (logical) row index, not by
    # a zero-weight multiply: a select is safe even over garbage tail DMA data.
    row0 = (c * tiles_per_chunk + i) * tile_n
    rows = row0 + jax.lax.broadcasted_iota(jnp.int32, (tile_n, 1), 0)
    contrib = jnp.where(rows < n_rows, base_loss * weight, 0.0)   # (tile_n, 1)
    acc_ref[...] += contrib                                       # elementwise only

    @pl.when(i == pl.num_programs(1) - 1)
    def _():
        # Single cross-sublane reduce per chunk (not per grid step).
        out_ref[...] = jnp.sum(acc_ref[...], axis=0, keepdims=True)


def directional_weighted_loss(logits, labels, direction_masks,
                              down_weight=2.0, up_weight=1.0,
                              tile_rows=None):
    """JAX/Pallas equivalent of DirectionalWeightedLoss.forward.

    logits:          (B, S, V) float (f32 or bf16)
    labels:          (B, S)    int   (class indices)
    direction_masks: (B,)      bool  (True -> DOWN example, weighted by down_weight)
    returns: scalar float32
    """
    B, S, V = logits.shape
    N = B * S

    logits2d = logits.reshape(N, V)
    labels2d = labels.reshape(N, 1).astype(jnp.int32)
    # Per-row f32 weight column (repeat_interleave(seq_length) semantics).
    weights2d = jnp.where(jnp.repeat(direction_masks, S),
                          jnp.float32(down_weight),
                          jnp.float32(up_weight)).reshape(N, 1)

    itemsize = jnp.dtype(logits.dtype).itemsize
    # Sublane packing: 8 rows/vreg for f32, 16 for bf16, 32 for 8-bit dtypes.
    row_align = max(8, 32 // itemsize)

    # Generation-aware VMEM budget: ~3/4 of physical scoped VMEM per core
    # (96 MiB on v5e/v6e with 128 MiB, 48 MiB on v7x with 64 MiB).
    try:
        vmem_cap = int(pltpu.get_tpu_info().vmem_capacity_bytes)
    except Exception:  # pragma: no cover - conservative fallback
        vmem_cap = 64 * 1024 * 1024
    vmem_limit = int(min((vmem_cap * 3) // 4, 96 * 1024 * 1024))

    # Per-row VMEM cost: 2x logits tile buffers + 2x labels + 2x weights
    # (narrow columns lane-pad to 128) + the (tile_n, 1) accumulator scratch.
    narrow_row_bytes = 128 * 4
    per_row_bytes = 2 * V * itemsize + 5 * narrow_row_bytes
    budget = max(per_row_bytes * row_align, vmem_limit - 4 * 1024 * 1024)

    if tile_rows is None:
        max_rows_vmem = budget // per_row_bytes
        max_rows_logits = (16 * 1024 * 1024) // max(1, V * itemsize)  # <=16 MiB logits/tile
        tile_n = int(min(max_rows_vmem, max_rows_logits))
    else:
        tile_n = int(tile_rows)
    tile_n = min(tile_n, _round_up(N, row_align))
    tile_n = max(row_align, (tile_n // row_align) * row_align)

    # Grid: (chunks, tiles-per-chunk).  The chunk axis is "parallel" so the two
    # TensorCores on v7x split the stream; the inner axis is the reduction.
    tiles_total = pl.cdiv(N, tile_n)
    num_chunks = 2 if tiles_total >= 2 else 1
    tiles_per_chunk = pl.cdiv(tiles_total, num_chunks)

    def row_map(c, i):
        # Clamp so no block is fully out of bounds; clamped (duplicated) tiles
        # are zeroed in-kernel via the global-row mask.
        t = jnp.minimum(c * tiles_per_chunk + i, tiles_total - 1)
        return (t, 0)

    kernel = functools.partial(_dwl_kernel, tile_n=tile_n,
                               tiles_per_chunk=tiles_per_chunk, n_rows=N)

    partials = pl.pallas_call(
        kernel,
        out_shape=jax.ShapeDtypeStruct((num_chunks, 1), jnp.float32),
        grid_spec=pltpu.PrefetchScalarGridSpec(
            num_scalar_prefetch=0,
            grid=(num_chunks, tiles_per_chunk),
            in_specs=[
                pl.BlockSpec((tile_n, V), row_map),
                pl.BlockSpec((tile_n, 1), row_map),
                pl.BlockSpec((tile_n, 1), row_map),
            ],
            out_specs=pl.BlockSpec((1, 1), lambda c, i: (c, 0)),
            scratch_shapes=[pltpu.VMEM((tile_n, 1), jnp.float32)],
        ),
        compiler_params=pltpu.CompilerParams(
            dimension_semantics=("parallel", "arbitrary"),
            vmem_limit_bytes=vmem_limit,
        ),
        cost_estimate=pl.CostEstimate(
            flops=6 * N * V,
            transcendentals=N * V,
            bytes_accessed=N * V * itemsize + 8 * N + 4 * num_chunks,
        ),
    )(logits2d, labels2d, weights2d)

    # TODO(synk): for very large vocab sizes, additionally tile the class axis
    # with an online logsumexp; not needed at these shapes.
    # TODO(synk): for V < 128, pack several rows into the lane axis (or fall
    # back to plain XLA) so each 128-lane vreg is fully utilized.
    return jnp.sum(partials) / jnp.float32(N)


def _reference(logits, labels, direction_masks, down_weight=2.0, up_weight=1.0):
    B, S, V = logits.shape
    lg = logits.reshape(-1, V).astype(jnp.float32)
    lb = labels.reshape(-1)
    logp = jax.nn.log_softmax(lg, axis=-1)
    base = -jnp.take_along_axis(logp, lb[:, None], axis=-1)[:, 0]
    m = jnp.repeat(direction_masks, S)
    w = jnp.where(m, down_weight, up_weight)
    return jnp.mean(base * w)


if __name__ == "__main__":
    key = jax.random.PRNGKey(0)
    k1, k2, k3 = jax.random.split(key, 3)

    # Small shapes consistent with the module: batch=2, seq=8, classes=32.
    B, S, V = 2, 8, 32
    logits = jax.random.normal(k1, (B, S, V), dtype=jnp.float32)
    labels = jax.random.randint(k2, (B, S), 0, V, dtype=jnp.int32)
    direction_masks = jax.random.bernoulli(k3, 0.5, (B,))

    # Default (auto) tile sizing: single tile, single chunk.
    out = jax.block_until_ready(
        directional_weighted_loss(logits, labels, direction_masks))
    ref = _reference(logits, labels, direction_masks)
    assert jnp.allclose(out, ref, atol=1e-5, rtol=1e-5), (out, ref)

    # Forced small tiles: exercises 2 chunks x accumulator path.
    out_b = jax.block_until_ready(
        directional_weighted_loss(logits, labels, direction_masks, tile_rows=8))
    assert jnp.allclose(out_b, ref, atol=1e-5, rtol=1e-5), (out_b, ref)

    # Ragged row count: exercises the partial (overrunning) last tile mask.
    B2, S2 = 2, 5
    logits2 = jax.random.normal(k1, (B2, S2, V), dtype=jnp.float32)
    labels2 = jax.random.randint(k2, (B2, S2), 0, V, dtype=jnp.int32)
    masks2 = jax.random.bernoulli(k3, 0.5, (B2,))
    out2 = jax.block_until_ready(
        directional_weighted_loss(logits2, labels2, masks2, tile_rows=8))
    ref2 = _reference(logits2, labels2, masks2)
    assert jnp.allclose(out2, ref2, atol=1e-5, rtol=1e-5), (out2, ref2)

    # Odd tile count (3 tiles, 2 chunks): exercises the clamped duplicate tile.
    B3, S3 = 3, 8
    logits3 = jax.random.normal(k1, (B3, S3, V), dtype=jnp.float32)
    labels3 = jax.random.randint(k2, (B3, S3), 0, V, dtype=jnp.int32)
    masks3 = jax.random.bernoulli(k3, 0.5, (B3,))
    out3 = jax.block_until_ready(
        directional_weighted_loss(logits3, labels3, masks3, tile_rows=8))
    ref3 = _reference(logits3, labels3, masks3)
    assert jnp.allclose(out3, ref3, atol=1e-5, rtol=1e-5), (out3, ref3)

    print("KERNEL_OK")
</pallas_src>

<mosaic_0001>
module attributes {stable_mosaic.version = 11 : i64} {
  func.func @_dwl_kernel(%arg0: i32, %arg1: i32, %arg2: memref<16x32xf32, #tpu.memory_space<vmem>>, %arg3: memref<16x1xi32, #tpu.memory_space<vmem>>, %arg4: memref<16x1xf32, #tpu.memory_space<vmem>>, %arg5: memref<1x1xf32, #tpu.memory_space<vmem>>, %arg6: memref<16x1xf32, #tpu.memory_space<vmem>>) attributes {dimension_semantics = [#tpu.dimension_semantics<parallel>, #tpu.dimension_semantics<arbitrary>], iteration_bounds = array<i64: 1, 1>, scalar_prefetch = 0 : i64, scratch_operands = 1 : i64, tpu.core_type = #tpu.core_type<tc>, window_params = [{transform_indices = @transform_0, window_bounds = array<i64: 16, 32>}, {transform_indices = @transform_1, window_bounds = array<i64: 16, 1>}, {transform_indices = @transform_2, window_bounds = array<i64: 16, 1>}, {transform_indices = @transform_3, window_bounds = array<i64: 1, 1>}]} {
    %c0_i32 = arith.constant 0 : i32
    %0 = arith.cmpi eq, %arg1, %c0_i32 : i32
    %1 = arith.extui %0 : i1 to i32
    %c0_i32_0 = arith.constant 0 : i32
    %2 = arith.cmpi ne, %1, %c0_i32_0 : i32
    scf.if %2 {
      %cst_17 = arith.constant 0.000000e+00 : f32
      %40 = vector.broadcast %cst_17 : f32 to vector<16x1xf32>
      %c0_18 = arith.constant 0 : index
      %c0_19 = arith.constant 0 : index
      %41 = vector.load %arg6[%c0_18, %c0_19] : memref<16x1xf32, #tpu.memory_space<vmem>>, vector<16x1xf32>
      tpu.vector_store %arg6[%c0_18, %c0_19], %40 {strides = array<i32>} : memref<16x1xf32, #tpu.memory_space<vmem>>, vector<16x1xf32>,
    } else {
    }
    %c0 = arith.constant 0 : index
    %c0_1 = arith.constant 0 : index
    %3 = vector.load %arg2[%c0, %c0_1] : memref<16x32xf32, #tpu.memory_space<vmem>>, vector<16x32xf32>
    %c0_2 = arith.constant 0 : index
    %c0_3 = arith.constant 0 : index
    %4 = vector.load %arg3[%c0_2, %c0_3] : memref<16x1xi32, #tpu.memory_space<vmem>>, vector<16x1xi32>
    %c0_4 = arith.constant 0 : index
    %c0_5 = arith.constant 0 : index
    %5 = vector.load %arg4[%c0_4, %c0_5] : memref<16x1xf32, #tpu.memory_space<vmem>>, vector<16x1xf32>
    %cst = arith.constant dense<0xFF800000> : vector<16xf32>
    %6 = vector.multi_reduction <maximumf>, %3, %cst [1] : vector<16x32xf32> to vector<16xf32>
    %7 = vector.shape_cast %6 : vector<16xf32> to vector<16x1xf32>
    %8 = vector.broadcast %7 : vector<16x1xf32> to vector<16x32xf32>
    %9 = arith.subf %3, %8 : vector<16x32xf32>
    %10 = math.exp %9 : vector<16x32xf32>
    %cst_6 = arith.constant dense<0.000000e+00> : vector<16xf32>
    %11 = vector.multi_reduction <add>, %10, %cst_6 [1] : vector<16x32xf32> to vector<16xf32>
    %12 = vector.shape_cast %11 : vector<16xf32> to vector<16x1xf32>
    %13 = tpu.iota {dimensions = array<i32: 1>} : vector<1x32xi32>
    %14 = vector.broadcast %13 : vector<1x32xi32> to vector<16x32xi32>
    %15 = vector.broadcast %4 : vector<16x1xi32> to vector<16x32xi32>
    %16 = arith.cmpi eq, %14, %15 : vector<16x32xi32>
    %cst_7 = arith.constant 0.000000e+00 : f32
    %17 = vector.broadcast %cst_7 : f32 to vector<16x32xf32>
    %18 = arith.select %16, %9, %17 : vector<16x32xi1>, vector<16x32xf32>
    %cst_8 = arith.constant dense<0.000000e+00> : vector<16xf32>
    %19 = vector.multi_reduction <add>, %18, %cst_8 [1] : vector<16x32xf32> to vector<16xf32>
    %20 = vector.shape_cast %19 : vector<16xf32> to vector<16x1xf32>
    %21 = math.log %12 : vector<16x1xf32>
    %22 = arith.subf %21, %20 : vector<16x1xf32>
    %c1_i32 = arith.constant 1 : i32
    %23 = arith.muli %arg0, %c1_i32 : i32
    %24 = arith.addi %23, %arg1 : i32
    %c16_i32 = arith.constant 16 : i32
    %25 = arith.muli %24, %c16_i32 : i32
    %26 = tpu.iota {dimensions = array<i32: 0>} : vector<16x1xi32>
    %27 = vector.broadcast %25 : i32 to vector<16x1xi32>
    %28 = arith.addi %27, %26 : vector<16x1xi32>
    %c16_i32_9 = arith.constant 16 : i32
    %29 = vector.broadcast %c16_i32_9 : i32 to vector<16x1xi32>
    %30 = arith.cmpi slt, %28, %29 : vector<16x1xi32>
    %31 = arith.mulf %22, %5 : vector<16x1xf32>
    %cst_10 = arith.constant 0.000000e+00 : f32
    %32 = vector.broadcast %cst_10 : f32 to vector<16x1xf32>
    %33 = arith.select %30, %31, %32 : vector<16x1xi1>, vector<16x1xf32>
    %c0_11 = arith.constant 0 : index
    %c0_12 = arith.constant 0 : index
    %34 = vector.load %arg6[%c0_11, %c0_12] : memref<16x1xf32, #tpu.memory_space<vmem>>, vector<16x1xf32>
    %35 = arith.addf %34, %33 : vector<16x1xf32>
    %c0_13 = arith.constant 0 : index
    %c0_14 = arith.constant 0 : index
    %36 = vector.load %arg6[%c0_13, %c0_14] : memref<16x1xf32, #tpu.memory_space<vmem>>, vector<16x1xf32>
    tpu.vector_store %arg6[%c0_13, %c0_14], %35 {strides = array<i32>} : memref<16x1xf32, #tpu.memory_space<vmem>>, vector<16x1xf32>,
    %c0_i32_15 = arith.constant 0 : i32
    %37 = arith.cmpi eq, %arg1, %c0_i32_15 : i32
    %38 = arith.extui %37 : i1 to i32
    %c0_i32_16 = arith.constant 0 : i32
    %39 = arith.cmpi ne, %38, %c0_i32_16 : i32
    scf.if %39 {
      %c0_17 = arith.constant 0 : index
      %c0_18 = arith.constant 0 : index
      %40 = vector.load %arg6[%c0_17, %c0_18] : memref<16x1xf32, #tpu.memory_space<vmem>>, vector<16x1xf32>
      %cst_19 = arith.constant dense<0.000000e+00> : vector<1xf32>
      %41 = vector.multi_reduction <add>, %40, %cst_19 [0] : vector<16x1xf32> to vector<1xf32>
      %42 = vector.shape_cast %41 : vector<1xf32> to vector<1x1xf32>
      %c0_20 = arith.constant 0 : index
      %c0_21 = arith.constant 0 : index
      %43 = vector.load %arg5[%c0_20, %c0_21] : memref<1x1xf32, #tpu.memory_space<vmem>>, vector<1x1xf32>
      tpu.vector_store %arg5[%c0_20, %c0_21], %42 {strides = array<i32>} : memref<1x1xf32, #tpu.memory_space<vmem>>, vector<1x1xf32>,
    } else {
    }
    return
  }
  func.func @transform_0(%arg0: i32, %arg1: i32) -> (i32, i32) {
    %c1_i32 = arith.constant 1 : i32
    %0 = arith.muli %arg0, %c1_i32 : i32
    %1 = arith.addi %0, %arg1 : i32
    %c0_i32 = arith.constant 0 : i32
    %2 = arith.minsi %1, %c0_i32 : i32
    %c0_i32_0 = arith.constant 0 : i32
    %c0_i32_1 = arith.constant 0 : i32
    return %2, %c0_i32_0 : i32, i32
  }
  func.func @transform_1(%arg0: i32, %arg1: i32) -> (i32, i32) {
    %c1_i32 = arith.constant 1 : i32
    %0 = arith.muli %arg0, %c1_i32 : i32
    %1 = arith.addi %0, %arg1 : i32
    %c0_i32 = arith.constant 0 : i32
    %2 = arith.minsi %1, %c0_i32 : i32
    %c0_i32_0 = arith.constant 0 : i32
    %c0_i32_1 = arith.constant 0 : i32
    return %2, %c0_i32_0 : i32, i32
  }
  func.func @transform_2(%arg0: i32, %arg1: i32) -> (i32, i32) {
    %c1_i32 = arith.constant 1 : i32
    %0 = arith.muli %arg0, %c1_i32 : i32
    %1 = arith.addi %0, %arg1 : i32
    %c0_i32 = arith.constant 0 : i32
    %2 = arith.minsi %1, %c0_i32 : i32
    %c0_i32_0 = arith.constant 0 : i32
    %c0_i32_1 = arith.constant 0 : i32
    return %2, %c0_i32_0 : i32, i32
  }
  func.func @transform_3(%arg0: i32, %arg1: i32) -> (i32, i32) {
    %c0_i32 = arith.constant 0 : i32
    %c0_i32_0 = arith.constant 0 : i32
    return %arg0, %c0_i32 : i32, i32
  }
}

</mosaic_0001>

<llo_original>
// kernel: tpu_custom_call.1
$region0: #{tpu_custom_call.1}
  #allocation0 [shape = 'u32[]', space=smem, size = 0x4, offset = 0x4, fixed_abs, tag = 'smem constant byte address 0x4 - core index']
  #allocation1 [shape = 'u32[144,128]{1,0:T(1,128)}', space=vmem, size = 0x12000, scoped, tag = 'internal scratch']
  #allocation2 [shape = 'f32[16,1]{1,0:T(8,128)}', space=vmem, size = 0x2000, scoped, tag = 'scratch operand']
  %s0 = inlined_call_operand.vmem [shape: f32[16,32], index: 0, kind: input, shape index: {}]
  %s1 = inlined_call_operand.vmem [shape: s32[16,1], index: 1, kind: input, shape index: {}]
  %s2 = inlined_call_operand.vmem [shape: f32[16,1], index: 2, kind: input, shape index: {}]
  %s3 = inlined_call_operand.hbm [shape: f32[1,1], index: 3, kind: output, shape index: {}]
  %s4 = sld [smem:[#allocation0]]
  $region30: #{tpu_custom_call.1} parent=0
    _
  %s6 = ssub.s32 1, %s4
  %s7 = scalar_select 0, %s6, %s4
  $region1: #{tpu_custom_call.1} parent=0
    #allocation3 [shape = 'u8[512]{0}', space=vmem, size = 0x400, scoped, tag = 'output window, operand 0, single buffered']
    #allocation4 [shape = 's32[1]{0}', space=sflag, size = 0x4, scoped, tag = 'scoped memory for tpu_custom_call.1']
    %8 = vsyncpa [#allocation4], 0
    // Predicated region
    $region2: #{tpu_custom_call.1} parent=1 // pred_check
      _
    $region3: #{tpu_custom_call.1} parent=1 // pred_check_branch
      %10 = sbr.rel (0) target = $region5
    $region4: #{tpu_custom_call.1} parent=1 // pred_region
      %s11 = sadd.s32 0, 0
      %p12 = scmp.lt.s32.totalorder %s11, 0
      %s13 = scalar_select %p12, %s11, 0
      %s14 = smul.u32 2, %s13
      %p15 = scmp.lt.s32.totalorder %s14, 1
      %s16 = scalar_select %p15, %s14, 1
      %s17 = smul.addr %s16, 8
      %s18 = scalar_lea.vmem %s0, %s17
      %s19 = sadd.s32 0, 0
      %p20 = scmp.lt.s32.totalorder %s19, 0
      %s21 = scalar_select %p20, %s19, 0
      %s22 = smul.u32 2, %s21
    $region5: #{tpu_custom_call.1} parent=1 // pred_fallthru
      _
    // Predicated region
    $region6: #{tpu_custom_call.1} parent=1 // pred_check
      _
    $region7: #{tpu_custom_call.1} parent=1 // pred_check_branch
      %24 = sbr.rel (0) target = $region9
    $region8: #{tpu_custom_call.1} parent=1 // pred_region
      %s25 = sadd.s32 0, 0
      %p26 = scmp.lt.s32.totalorder %s25, 0
      %s27 = scalar_select %p26, %s25, 0
      %s28 = smul.u32 2, %s27
      %p29 = scmp.lt.s32.totalorder %s28, 1
      %s30 = scalar_select %p29, %s28, 1
      %s31 = smul.addr %s30, 8
      %s32 = scalar_lea.vmem %s1, %s31
      %s33 = sadd.s32 0, 0
      %p34 = scmp.lt.s32.totalorder %s33, 0
      %s35 = scalar_select %p34, %s33, 0
      %s36 = smul.u32 2, %s35
    $region9: #{tpu_custom_call.1} parent=1 // pred_fallthru
      _
    // Predicated region
    $region10: #{tpu_custom_call.1} parent=1 // pred_check
      _
    $region11: #{tpu_custom_call.1} parent=1 // pred_check_branch
      %38 = sbr.rel (0) target = $region13
    $region12: #{tpu_custom_call.1} parent=1 // pred_region
      %s39 = sadd.s32 0, 0
      %p40 = scmp.lt.s32.totalorder %s39, 0
      %s41 = scalar_select %p40, %s39, 0
      %s42 = smul.u32 2, %s41
      %p43 = scmp.lt.s32.totalorder %s42, 1
      %s44 = scalar_select %p43, %s42, 1
      %s45 = smul.addr %s44, 8
      %s46 = scalar_lea.vmem %s2, %s45
      %s47 = sadd.s32 0, 0
      %p48 = scmp.lt.s32.totalorder %s47, 0
      %s49 = scalar_select %p48, %s47, 0
      %s50 = smul.u32 2, %s49
    $region13: #{tpu_custom_call.1} parent=1 // pred_fallthru
      _
    %s51 = sadd.s32 0, 0
    %p52 = scmp.lt.s32.totalorder %s51, 0
    %s53 = scalar_select %p52, %s51, 0
    %s54 = smul.u32 2, %s53
    %p55 = scmp.lt.s32.totalorder %s54, 1
    %s56 = scalar_select %p55, %s54, 1
    %s57 = smul.addr %s56, 8
    %s58 = scalar_lea.vmem %s0, %s57
    %s59 = sadd.s32 0, 0
    %p60 = scmp.lt.s32.totalorder %s59, 0
    %s61 = scalar_select %p60, %s59, 0
    %s62 = smul.u32 2, %s61
    %p63 = scmp.lt.s32.totalorder %s62, 1
    %s64 = scalar_select %p63, %s62, 1
    %s65 = smul.addr %s64, 8
    %s66 = scalar_lea.vmem %s1, %s65
    %s67 = sadd.s32 0, 0
    %p68 = scmp.lt.s32.totalorder %s67, 0
    %s69 = scalar_select %p68, %s67, 0
    %s70 = smul.u32 2, %s69
    %p71 = scmp.lt.s32.totalorder %s70, 1
    %s72 = scalar_select %p71, %s70, 1
    %s73 = smul.addr %s72, 8
    %s74 = scalar_lea.vmem %s2, %s73
    %s75 = sadd.s32 0, 0
    %p76 = scmp.lt.s32.totalorder %s75, 0
    %s77 = scalar_select %p76, %s75, 0
    %s78 = smul.u32 2, %s77
    %p79 = scmp.lt.s32.totalorder %s78, 1
    %s80 = scalar_select %p79, %s78, 1
    %s81 = smul.addr %s80, 8
    %s82 = scalar_lea.vmem %s0, %s81
    %s83 = sadd.s32 0, 0
    %p84 = scmp.lt.s32.totalorder %s83, 0
    %s85 = scalar_select %p84, %s83, 0
    %s86 = smul.u32 2, %s85
    %s87 = sadd.s32 0, 0
    %p88 = scmp.lt.s32.totalorder %s87, 0
    %s89 = scalar_select %p88, %s87, 0
    %s90 = smul.u32 2, %s89
    %p91 = scmp.lt.s32.totalorder %s90, 1
    %s92 = scalar_select %p91, %s90, 1
    %s93 = smul.addr %s92, 8
    %s94 = scalar_lea.vmem %s1, %s93
    %s95 = sadd.s32 0, 0
    %p96 = scmp.lt.s32.totalorder %s95, 0
    %s97 = scalar_select %p96, %s95, 0
    %s98 = smul.u32 2, %s97
    %s99 = sadd.s32 0, 0
    %p100 = scmp.lt.s32.totalorder %s99, 0
    %s101 = scalar_select %p100, %s99, 0
    %s102 = smul.u32 2, %s101
    %p103 = scmp.lt.s32.totalorder %s102, 1
    %s104 = scalar_select %p103, %s102, 1
    %s105 = smul.addr %s104, 8
    %s106 = scalar_lea.vmem %s2, %s105
    %s107 = sadd.s32 0, 0
    %p108 = scmp.lt.s32.totalorder %s107, 0
    %s109 = scalar_select %p108, %s107, 0
    %s110 = smul.u32 2, %s109
    %p111 = scmp.eq.s32.totalorder 0, 0
    // Predicated region
    $region14: #{tpu_custom_call.1} parent=1 // pred_check
      %p112 = pneg %p111
    $region15: #{tpu_custom_call.1} parent=1 // pred_check_branch
      %114 = sbr.rel (%p112) target = $region17
    $region16: #{tpu_custom_call.1} parent=1 // pred_region
      %vm115 = vcmask 7168
      %116 = vst.msk [vmem:[#allocation2] sm:$0xff] %vm115, 0.0
      %117 = vst.msk [vmem:[#allocation2 + $0x8] sm:$0xff] %vm115, 0.0
    $region17: #{tpu_custom_call.1} parent=1 // pred_fallthru
      _
    %v118 = vld [vmem:[%s82] sm:$0xff]
    %v119 = vld [vmem:[%s82 + $0x8] sm:$0xff]
    %v120 = vld [vmem:[%s94] sm:$0xff]
    %v121 = vld [vmem:[%s94 + $0x8] sm:$0xff]
    %v122 = vld [vmem:[%s106] sm:$0xff]
    %v123 = vld [vmem:[%s106 + $0x8] sm:$0xff]
    %vm124 = vcmask 261120
    %v125 = vsel %vm124, %v118, -inf
    %126 = vmax.xlane.f32.xlu0 %v125
    %v127 = vpop.xlane.xlu0 %126
    %v128 = vsel %vm124, %v119, -inf
    %129 = vmax.xlane.f32.xlu0 %v128
    %v130 = vpop.xlane.xlu0 %129
    %v131 = vsub.f32 %v118, %v127
    %v132 = vsub.f32 %v119, %v130
    %v133 = vmul.f32 %v131, 1.442695
    %v134 = vpow.pop %v133
    %v135 = vmul.f32 %v132, 1.442695
    %v136 = vpow.pop %v135
    %v137 = vsel %vm124, %v134, 0.0
    %138 = vadd.xlane.f32.xlu0 %v137
    %v139 = vpop.xlane.xlu0 %138
    %v140 = vsel %vm124, %v136, 0.0
    %141 = vadd.xlane.f32.xlu0 %v140
    %v142 = vpop.xlane.xlu0 %141
    %v143 = vlaneseq
    %v144 = vand.u32 %v143, 127
    %145 = vset.pattern.permute.xlu0 0
    %146 = vperm.xlu0 %145, %v120
    %v147 = vpop.permute.xlu0 %146
    %148 = vset.pattern.permute.xlu0 0
    %149 = vperm.xlu0 %148, %v121
    %v150 = vpop.permute.xlu0 %149
    %vm151 = vcmp.eq.s32.totalorder %v144, %v147
    %vm152 = vcmp.eq.s32.totalorder %v144, %v150
    %v153 = vsel %vm151, %v131, 0.0
    %v154 = vsel %vm152, %v132, 0.0
    %v155 = vsel %vm124, %v153, 0.0
    %156 = vadd.xlane.f32.xlu0 %v155
    %v157 = vpop.xlane.xlu0 %156
    %v158 = vsel %vm124, %v154, 0.0
    %159 = vadd.xlane.f32.xlu0 %v158
    %v160 = vpop.xlane.xlu0 %159
    %v161 = vlog2.pop %v139
    %v162 = vmul.f32 %v161, 0.6931472
    %v163 = vlog2.pop %v142
    %v164 = vmul.f32 %v163, 0.6931472
    %v165 = vsub.f32 %v162, %v157
    %v166 = vsub.f32 %v164, %v160
    %s167 = sadd.s32 0, 0
    %s168 = smul.u32 %s167, 16
    %v169 = vlaneseq
    %v170 = vshrl.u32 %v169, 7
    %v171 = vadd.s32 %v170, 8
    %v172 = vstv %s168
    %v173 = vadd.s32 %v172, %v170
    %v174 = vadd.s32 %v172, %v171
    %vm175 = vcmp.lt.s32.totalorder %v173, 16
    %vm176 = vcmp.lt.s32.totalorder %v174, 16
    %v177 = vmul.f32 %v165, %v122
    %v178 = vmul.f32 %v166, %v123
    %v179 = vsel %vm175, %v177, 0.0
    %v180 = vsel %vm176, %v178, 0.0
    %v181 = vld [vmem:[#allocation2] sm:$0xff]
    %v182 = vld [vmem:[#allocation2 + $0x8] sm:$0xff]
    %v183 = vadd.f32 %v181, %v179
    %v184 = vadd.f32 %v182, %v180
    %vm185 = vcmask 7168
    %186 = vst.msk [vmem:[#allocation2] sm:$0xff] %vm185, %v183
    %187 = vst.msk [vmem:[#allocation2 + $0x8] sm:$0xff] %vm185, %v184
    // Predicated region
    $region18: #{tpu_custom_call.1} parent=1 // pred_check
      %p188 = pneg %p111
    $region19: #{tpu_custom_call.1} parent=1 // pred_check_branch
      %190 = sbr.rel (%p188) target = $region21
    $region20: #{tpu_custom_call.1} parent=1 // pred_region
      %v191 = vld [vmem:[#allocation2] sm:$0xff]
      %v192 = vld [vmem:[#allocation2 + $0x8] sm:$0xff]
      %v193 = vsel %vm185, %v191, 0.0
      %v194 = vsel %vm185, %v192, 0.0
      %v195 = vadd.f32 %v193, %v194
      %v196 = vrot.slane %v195, 4
      %v197 = vadd.f32 %v195, %v196
      %v198 = vrot.slane %v197, 2
      %v199 = vadd.f32 %v197, %v198
      %v200 = vrot.slane %v199, 1
      %v201 = vadd.f32 %v199, %v200
      %vm202 = vcmask 0
      %203 = vst.msk [vmem:[#allocation3] sm:$0x1] %vm202, %v201
    $region21: #{tpu_custom_call.1} parent=1 // pred_fallthru
      _
    // Predicated region
    $region22: #{tpu_custom_call.1} parent=1 // pred_check
      _
    $region23: #{tpu_custom_call.1} parent=1 // pred_check_branch
      %205 = sbr.rel (0) target = $region25
    $region24: #{tpu_custom_call.1} parent=1 // pred_region
      %s207 = ssub.s32 16, 16
      %208 = vsyncadd [#allocation4], %s207
      %s210 = sshll.u32 [#allocation3], 4
      %s211 = int_to_ptr.vmem [resolvable:$true] %s210
      %213 = dma.vmem_to_hbm [thread:$0]  %s211, 16, %s3, [#allocation4]
    $region25: #{tpu_custom_call.1} parent=1 // pred_fallthru
      _
    // Predicated region
    $region26: #{tpu_custom_call.1} parent=1 // pred_check
      _
    $region27: #{tpu_custom_call.1} parent=1 // pred_check_branch
      %215 = sbr.rel (0) target = $region29
    $region28: #{tpu_custom_call.1} parent=1 // pred_region
      %216 = dma.done [#allocation4], 16
    $region29: #{tpu_custom_call.1} parent=1 // pred_fallthru
      _
    %217 = vsyncpa [#allocation4], 1

</llo_original>
